<compile_context>
chip_gen: v6e
topology: v6e:2x2x1
jax: 0.10.0
libtpu: 0.0.40
codegen_flags: <defaults>
</compile_context>

<pallas_src>
import jax
import jax.numpy as jnp
from jax.experimental import pallas as pl
from jax.experimental.pallas import tpu as pltpu


def _residual_linear_kernel(x_ref, wt_ref, b_ref, o_ref):
    # x_ref : (TM, H) f32 activation tile
    # wt_ref: (H, H)  bf16 weight, pre-transposed to (in, out) in the wrapper
    # b_ref : (1, H)  f32 bias
    # o_ref : (TM, H) output tile = x @ W^T + b + x
    x = x_ref[...]
    # bf16 operands on the MXU, f32 accumulation; standard (1,0) contraction so
    # no in-kernel transpose of W is emitted.
    y = jnp.dot(x.astype(jnp.bfloat16), wt_ref[...],
                preferred_element_type=jnp.float32)
    o_ref[...] = (y + b_ref[...] + x).astype(o_ref.dtype)


def _vmem_capacity_bytes():
    try:
        info = pltpu.get_tpu_info()
        cap = getattr(info, "vmem_capacity_bytes", None)
        if cap:
            return int(cap)
    except Exception:
        pass
    return 64 * 1024 * 1024  # conservative fallback (v7x per-TC)


def _pick_tm(M, target):
    """Row tile that divides M exactly, is a multiple of 8 (f32 sublane), and
    is <= target; prefers >= 2 blocks when cleanly possible (v7x two TCs)."""
    if M % 8 != 0:
        return M                                   # single full-extent block (legal)
    cap = min(target, M)
    if M <= target and M >= 16:
        cap = max(8, ((M // 2) // 8) * 8)          # ensure grid >= 2 for small M
    t = max(8, (cap // 8) * 8)
    while t >= 8:
        if M % t == 0:
            return t
        t -= 8
    return M


def residual_linear(x, w, b, *, tm=None):
    """Fused Linear(x) + x  (PyTorch semantics: x @ W^T + b + x).

    x: (B, S, H) float32
    w: (H, H)    float32, PyTorch Linear weight (out, in)
    b: (H,)      float32
    """
    B, S, H = x.shape
    M = B * S
    x2d = x.reshape(M, H)
    wt = w.T.astype(jnp.bfloat16)        # one cheap pass; (in, out) layout, bf16
    b2d = b.reshape(1, H).astype(jnp.float32)

    # Generation-aware tile / VMEM budgeting.
    vmem_phys = _vmem_capacity_bytes()
    budget = int(vmem_phys * 0.70)
    w_bytes = 2 * H * H * 2 + 2 * H * 4            # double-buffered bf16 W + f32 bias
    row_bytes = 2 * H * 4 + 2 * H * 4              # double-buffered x + out rows (f32)
    tm_max = max(8, ((budget - w_bytes) // row_bytes) // 8 * 8)
    target = tm if tm is not None else (2048 if vmem_phys > (64 << 20) else 1024)
    target = max(8, min(target, tm_max))

    tm_eff = _pick_tm(M, target)
    n_blocks = M // tm_eff

    # Exact double-buffered need (+50% headroom), capped below physical VMEM.
    needed = 2 * tm_eff * H * 4 + 2 * tm_eff * H * 4 + w_bytes
    vmem_limit = min(max(int(needed * 1.5), 16 << 20), int(vmem_phys * 0.78))

    cost = pl.CostEstimate(
        flops=2 * M * H * H,
        bytes_accessed=2 * M * H * 4 + H * H * 2 + H * 4,
        transcendentals=0,
    )

    out2d = pl.pallas_call(
        _residual_linear_kernel,
        out_shape=jax.ShapeDtypeStruct((M, H), x.dtype),
        grid=(n_blocks,),
        in_specs=[
            pl.BlockSpec((tm_eff, H), lambda i: (i, 0)),   # x tile (pipelined)
            pl.BlockSpec((H, H), lambda i: (0, 0)),        # W^T resident (constant index)
            pl.BlockSpec((1, H), lambda i: (0, 0)),        # bias resident
        ],
        out_specs=pl.BlockSpec((tm_eff, H), lambda i: (i, 0)),
        compiler_params=pltpu.CompilerParams(
            dimension_semantics=("parallel",),             # rows independent
            vmem_limit_bytes=vmem_limit,
        ),
        cost_estimate=cost,
    )(x2d, wt, b2d)

    return out2d.reshape(B, S, H)


def residual_linear_ref(x, w, b):
    # pure-JAX reference: Linear(x) + x  (PyTorch semantics: x @ W^T + b)
    return jnp.einsum("bsh,oh->bso", x, w) + b + x


if __name__ == "__main__":
    key = jax.random.PRNGKey(0)
    kx, kw, kb = jax.random.split(key, 3)

    B, S, H = 2, 8, 128
    x = jax.random.normal(kx, (B, S, H), dtype=jnp.float32)
    # deterministic synthetic parameters for the wrapped fn (nn.Linear(H, H))
    w = jax.random.normal(kw, (H, H), dtype=jnp.float32) * (1.0 / jnp.sqrt(H))
    b = jax.random.normal(kb, (H,), dtype=jnp.float32) * 0.01

    out = jax.block_until_ready(residual_linear(x, w, b))
    ref = residual_linear_ref(x, w, b)

    assert out.shape == (B, S, H)
    # bf16 MXU operands (f32 accumulation): tolerance loosened vs. pure-f32 ref.
    assert jnp.allclose(out, ref, atol=5e-2, rtol=5e-2)
    print("KERNEL_OK")
</pallas_src>

<mosaic_0001>
module attributes {stable_mosaic.version = 11 : i64} {
  func.func @_residual_linear_kernel(%arg0: i32, %arg1: memref<8x128xf32, #tpu.memory_space<vmem>>, %arg2: memref<128x128xbf16, #tpu.memory_space<vmem>>, %arg3: memref<1x128xf32, #tpu.memory_space<vmem>>, %arg4: memref<8x128xf32, #tpu.memory_space<vmem>>) attributes {dimension_semantics = [#tpu.dimension_semantics<parallel>], iteration_bounds = array<i64: 2>, scalar_prefetch = 0 : i64, scratch_operands = 0 : i64, tpu.core_type = #tpu.core_type<tc>, window_params = [{transform_indices = @transform_0, window_bounds = array<i64: 8, 128>}, {pipeline_mode = #tpu.pipeline_mode<synchronous>, transform_indices = @transform_1, window_bounds = array<i64: 128, 128>}, {pipeline_mode = #tpu.pipeline_mode<synchronous>, transform_indices = @transform_2, window_bounds = array<i64: 1, 128>}, {transform_indices = @transform_3, window_bounds = array<i64: 8, 128>}]} {
    %c0 = arith.constant 0 : index
    %c0_0 = arith.constant 0 : index
    %0 = vector.load %arg1[%c0, %c0_0] : memref<8x128xf32, #tpu.memory_space<vmem>>, vector<8x128xf32>
    %1 = arith.truncf %0 : vector<8x128xf32> to vector<8x128xbf16>
    %c0_1 = arith.constant 0 : index
    %c0_2 = arith.constant 0 : index
    %2 = vector.load %arg2[%c0_1, %c0_2] : memref<128x128xbf16, #tpu.memory_space<vmem>>, vector<128x128xbf16>
    %cst = arith.constant dense<0.000000e+00> : vector<8x128xf32>
    %3 = tpu.matmul %1, %2, %cst {dimension_numbers = #tpu.dot_dimension_numbers<[1], [0], [0], [1], [0, 0, 1, 1], [], []>} : vector<8x128xbf16>, vector<128x128xbf16>, vector<8x128xf32> -> vector<8x128xf32>
    %c0_3 = arith.constant 0 : index
    %c0_4 = arith.constant 0 : index
    %4 = vector.load %arg3[%c0_3, %c0_4] : memref<1x128xf32, #tpu.memory_space<vmem>>, vector<1x128xf32>
    %5 = vector.broadcast %4 : vector<1x128xf32> to vector<8x128xf32>
    %6 = arith.addf %3, %5 : vector<8x128xf32>
    %7 = arith.addf %6, %0 : vector<8x128xf32>
    %c0_5 = arith.constant 0 : index
    %c0_6 = arith.constant 0 : index
    %8 = vector.load %arg4[%c0_5, %c0_6] : memref<8x128xf32, #tpu.memory_space<vmem>>, vector<8x128xf32>
    tpu.vector_store %arg4[%c0_5, %c0_6], %7 {strides = array<i32>} : memref<8x128xf32, #tpu.memory_space<vmem>>, vector<8x128xf32>,
    return
  }
  func.func @transform_0(%arg0: i32) -> (i32, i32) {
    %c0_i32 = arith.constant 0 : i32
    %c0_i32_0 = arith.constant 0 : i32
    return %arg0, %c0_i32 : i32, i32
  }
  func.func @transform_1(%arg0: i32) -> (i32, i32) {
    %c0_i32 = arith.constant 0 : i32
    %c0_i32_0 = arith.constant 0 : i32
    %c0_i32_1 = arith.constant 0 : i32
    return %c0_i32, %c0_i32_0 : i32, i32
  }
  func.func @transform_2(%arg0: i32) -> (i32, i32) {
    %c0_i32 = arith.constant 0 : i32
    %c0_i32_0 = arith.constant 0 : i32
    %c0_i32_1 = arith.constant 0 : i32
    return %c0_i32, %c0_i32_0 : i32, i32
  }
  func.func @transform_3(%arg0: i32) -> (i32, i32) {
    %c0_i32 = arith.constant 0 : i32
    %c0_i32_0 = arith.constant 0 : i32
    return %arg0, %c0_i32 : i32, i32
  }
}

</mosaic_0001>

<llo_original>
// kernel: tpu_custom_call.1
$region0: #{tpu_custom_call.1}
  #allocation0 [shape = 'u32[]', space=smem, size = 0x4, offset = 0x4, fixed_abs, tag = 'smem constant byte address 0x4 - core index']
  #allocation1 [shape = 'u32[144,128]{1,0:T(1,128)}', space=vmem, size = 0x12000, scoped, tag = 'internal scratch']
  %s0 = inlined_call_operand.hbm [shape: f32[16,128], index: 0, kind: input, shape index: {}]
  %s1 = inlined_call_operand.hbm [shape: bf16[128,128], index: 1, kind: input, shape index: {}]
  %s2 = inlined_call_operand.vmem [shape: f32[1,128], index: 2, kind: input, shape index: {}]
  %s3 = inlined_call_operand.hbm [shape: f32[16,128], index: 3, kind: output, shape index: {}]
  %s4 = sld [smem:[#allocation0]]
  $region53: #{tpu_custom_call.1} parent=0
    _
  %s6 = ssub.s32 1, %s4
  %s7 = scalar_select 0, %s6, %s4
  $region1: #{tpu_custom_call.1} parent=0
    #allocation2 [shape = 'u8[8192]{0}', space=vmem, size = 0x2000, scoped, tag = 'input window, operand 0']
    #allocation3 [shape = 's32[2]{0}', space=sflag, size = 0x8, scoped, tag = 'scoped memory for tpu_custom_call.1']
    #allocation4 [shape = 's32[2]{0}', space=sflag, size = 0x8, scoped, tag = 'scoped memory for tpu_custom_call.1']
    #allocation5 [shape = 'u8[32768]{0}', space=vmem, size = 0x8000, scoped, tag = 'input window, operand 1, single buffered']
    #allocation6 [shape = 's32[1]{0}', space=sflag, size = 0x4, scoped, tag = 'scoped memory for tpu_custom_call.1']
    #allocation7 [shape = 'u8[8192]{0}', space=vmem, size = 0x2000, scoped, tag = 'output window, operand 0']
    %8 = vsyncpa [#allocation3], 0
    %s9 = scalar_lea.sflag [#allocation3], 1
    %10 = vsyncpa %s9, 0
    %11 = vsyncpa [#allocation6], 0
    %12 = vsyncpa [#allocation4], 0
    %s13 = scalar_lea.sflag [#allocation4], 1
    %14 = vsyncpa %s13, 0
    loop: start=0, step=1, limit=4
    $region2: #{tpu_custom_call.1} parent=1 // loop_pre_header
      _
    $region3: #{tpu_custom_call.1} parent=1 // loop_header
      %s16 = sphi 0, %s20
      %p17 = scmp.ge.s32.totalorder %s16, 4
      %s26 = sphi 0, %s28
      %s29 = sphi 0, %s26
      %s30 = sphi 0, %s29
      %s46 = sphi 0, %s30
      %s50 = sphi 0, %s50
      %s52 = sphi 0, %s50
      %s53 = sphi 0, %s52
      %s67 = sphi 0, %s53
      %s71 = sphi 0, %s71
      %s73 = sphi 0, %s71
      %s74 = sphi 0, %s73
      %s88 = sphi 0, %s74
      %s94 = sphi 0, %s96
      %s97 = sphi 0, %s94
      %s98 = sphi 0, %s97
      %s114 = sphi 0, %s98
    $region4: #{tpu_custom_call.1} parent=1 // loop_header_branch
      %19 = sbr.rel (%p17) target = $region8
    $region5: #{tpu_custom_call.1} parent=1 // loop_body
      %s21 = ssub.s32 %s16, 1
      %s22 = ssub.s32 %s16, 2
      %s23 = sadd.s32 %s16, 1
      %s24 = ssub.s32 %s16, %s23
      %p25 = scmp.eq.s32.totalorder %s24, 0
      %s27 = sadd.s32 %s26, 1
      %s28 = scalar_select %p25, %s26, %s27
      %p31 = pneg %p25
      %p32 = scmp.eq.s32.totalorder %s16, 1
      %p33 = por %p31, %p32
      %p34 = scmp.ne.s32.totalorder %s26, %s29
      %p35 = scmp.eq.s32.totalorder %s16, 0
      %p36 = por %p34, %p35
      %p37 = scmp.ne.s32.totalorder %s26, %s29
      %p38 = scmp.eq.s32.totalorder %s21, 1
      %p39 = por %p37, %p38
      %p40 = scmp.ne.s32.totalorder %s29, %s30
      %p41 = scmp.eq.s32.totalorder %s21, 0
      %p42 = por %p40, %p41
      %p43 = scmp.ne.s32.totalorder %s29, %s30
      %p44 = scmp.eq.s32.totalorder %s22, 1
      %p45 = por %p43, %p44
      %p47 = scmp.ne.s32.totalorder %s30, %s46
      %p48 = scmp.eq.s32.totalorder %s22, 0
      %p49 = por %p47, %p48
      %s51 = sadd.s32 %s50, 1
      %p54 = scmp.eq.s32.totalorder %s16, 1
      %p55 = scmp.ne.s32.totalorder %s50, %s52
      %p56 = scmp.eq.s32.totalorder %s16, 0
      %p57 = por %p55, %p56
      %p58 = scmp.ne.s32.totalorder %s50, %s52
      %p59 = scmp.eq.s32.totalorder %s21, 1
      %p60 = por %p58, %p59
      %p61 = scmp.ne.s32.totalorder %s52, %s53
      %p62 = scmp.eq.s32.totalorder %s21, 0
      %p63 = por %p61, %p62
      %p64 = scmp.ne.s32.totalorder %s52, %s53
      %p65 = scmp.eq.s32.totalorder %s22, 1
      %p66 = por %p64, %p65
      %p68 = scmp.ne.s32.totalorder %s53, %s67
      %p69 = scmp.eq.s32.totalorder %s22, 0
      %p70 = por %p68, %p69
      %s72 = sadd.s32 %s71, 1
      %p75 = scmp.eq.s32.totalorder %s16, 1
      %p76 = scmp.ne.s32.totalorder %s71, %s73
      %p77 = scmp.eq.s32.totalorder %s16, 0
      %p78 = por %p76, %p77
      %p79 = scmp.ne.s32.totalorder %s71, %s73
      %p80 = scmp.eq.s32.totalorder %s21, 1
      %p81 = por %p79, %p80
      %p82 = scmp.ne.s32.totalorder %s73, %s74
      %p83 = scmp.eq.s32.totalorder %s21, 0
      %p84 = por %p82, %p83
      %p85 = scmp.ne.s32.totalorder %s73, %s74
      %p86 = scmp.eq.s32.totalorder %s22, 1
      %p87 = por %p85, %p86
      %p89 = scmp.ne.s32.totalorder %s74, %s88
      %p90 = scmp.eq.s32.totalorder %s22, 0
      %p91 = por %p89, %p90
      %s92 = ssub.s32 %s16, %s23
      %p93 = scmp.eq.s32.totalorder %s92, 0
      %s95 = sadd.s32 %s94, 1
      %s96 = scalar_select %p93, %s94, %s95
      %p99 = pneg %p93
      %p100 = scmp.eq.s32.totalorder %s16, 1
      %p101 = por %p99, %p100
      %p102 = scmp.ne.s32.totalorder %s94, %s97
      %p103 = scmp.eq.s32.totalorder %s16, 0
      %p104 = por %p102, %p103
      %p105 = scmp.ne.s32.totalorder %s94, %s97
      %p106 = scmp.eq.s32.totalorder %s21, 1
      %p107 = por %p105, %p106
      %p108 = scmp.ne.s32.totalorder %s97, %s98
      %p109 = scmp.eq.s32.totalorder %s21, 0
      %p110 = por %p108, %p109
      %p111 = scmp.ne.s32.totalorder %s97, %s98
      %p112 = scmp.eq.s32.totalorder %s22, 1
      %p113 = por %p111, %p112
      %p115 = scmp.ne.s32.totalorder %s98, %s114
      %p116 = scmp.eq.s32.totalorder %s22, 0
      %p117 = por %p115, %p116
      %p118 = scmp.le.s32.totalorder 1, %s16
      %p119 = scmp.lt.s32.totalorder %s16, 3
      %p120 = pnand %p118, %p119
      %p121 = pneg %p120
      // Predicated region
      $region9: #{tpu_custom_call.1} parent=5 // pred_check
        _
      $region10: #{tpu_custom_call.1} parent=5 // pred_check_branch
        %123 = sbr.rel (%p120) target = $region12
      $region11: #{tpu_custom_call.1} parent=5 // pred_region
        %s124 = ssub.s32 %s16, 1
        // Predicated region
        $region13: #{tpu_custom_call.1} parent=11 // pred_check
          %p125 = pneg %p63
        $region14: #{tpu_custom_call.1} parent=11 // pred_check_branch
          %127 = sbr.rel (%p125) target = $region16
        $region15: #{tpu_custom_call.1} parent=11 // pred_region
          %s129 = ssub.s32 1024, 1024
          %130 = vsyncadd [#allocation6], %s129
          %s131 = sshll.u32 [#allocation5], 4
          %s132 = int_to_ptr.vmem [resolvable:$true] %s131
          %137 = dma.hbm_to_vmem [thread:$0]  %s1, 1024, %s132, [#allocation6], 64, 64, 4
        $region16: #{tpu_custom_call.1} parent=11 // pred_fallthru
          _
        // Predicated region
        $region17: #{tpu_custom_call.1} parent=11 // pred_check
          %p138 = pneg %p84
        $region18: #{tpu_custom_call.1} parent=11 // pred_check_branch
          %140 = sbr.rel (%p138) target = $region20
        $region19: #{tpu_custom_call.1} parent=11 // pred_region
          _
        $region20: #{tpu_custom_call.1} parent=11 // pred_fallthru
          _
      $region12: #{tpu_custom_call.1} parent=5 // pred_fallthru
        _
      %p141 = scmp.lt.s32.totalorder %s16, 2
      // Predicated region
      $region21: #{tpu_custom_call.1} parent=5 // pred_check
        %p142 = pneg %p141
      $region22: #{tpu_custom_call.1} parent=5 // pred_check_branch
        %144 = sbr.rel (%p142) target = $region24
      $region23: #{tpu_custom_call.1} parent=5 // pred_region
        // Predicated region
        $region25: #{tpu_custom_call.1} parent=23 // pred_check
          %p145 = pneg %p36
        $region26: #{tpu_custom_call.1} parent=23 // pred_check_branch
          %147 = sbr.rel (%p145) target = $region28
        $region27: #{tpu_custom_call.1} parent=23 // pred_region
          %s148 = sand.u32 %s26, 1
          %s149 = scalar_lea.sflag [#allocation3], %s148
          %s150 = sand.u32 %s26, 1
          %s151 = smul.addr %s150, 8
          %s152 = scalar_lea.vmem [#allocation2], %s151
          %s154 = ssub.s32 128, 128
          %155 = vsyncadd %s149, %s154
          %s156 = smul.addr %s16, 128
          %s157 = scalar_lea.hbm %s0, %s156
          %s159 = sshll.u32 %s152, 4
          %s160 = int_to_ptr.vmem [resolvable:$true] %s159
          %162 = dma.hbm_to_vmem [thread:$0]  %s157, 128, %s160, %s149
        $region28: #{tpu_custom_call.1} parent=23 // pred_fallthru
          _
      $region24: #{tpu_custom_call.1} parent=5 // pred_fallthru
        _
      %p163 = scmp.le.s32.totalorder 1, %s16
      %p164 = scmp.lt.s32.totalorder %s16, 3
      %p165 = pnand %p163, %p164
      %p166 = pneg %p165
      // Predicated region
      $region29: #{tpu_custom_call.1} parent=5 // pred_check
        _
      $region30: #{tpu_custom_call.1} parent=5 // pred_check_branch
        %168 = sbr.rel (%p165) target = $region32
      $region31: #{tpu_custom_call.1} parent=5 // pred_region
        %s169 = ssub.s32 %s16, 1
        %s170 = sand.u32 %s29, 1
        %s171 = scalar_lea.sflag [#allocation3], %s170
        %s172 = sand.u32 %s29, 1
        %s173 = smul.addr %s172, 8
        %s174 = scalar_lea.vmem [#allocation2], %s173
        // Predicated region
        $region33: #{tpu_custom_call.1} parent=31 // pred_check
          %p175 = pneg %p42
        $region34: #{tpu_custom_call.1} parent=31 // pred_check_branch
          %177 = sbr.rel (%p175) target = $region36
        $region35: #{tpu_custom_call.1} parent=31 // pred_region
          %178 = dma.done %s171, 128
        $region36: #{tpu_custom_call.1} parent=31 // pred_fallthru
          _
        // Predicated region
        $region37: #{tpu_custom_call.1} parent=31 // pred_check
          %p179 = pneg %p63
        $region38: #{tpu_custom_call.1} parent=31 // pred_check_branch
          %181 = sbr.rel (%p179) target = $region40
        $region39: #{tpu_custom_call.1} parent=31 // pred_region
          %182 = dma.done [#allocation6], 1024
        $region40: #{tpu_custom_call.1} parent=31 // pred_fallthru
          _
        %s183 = sand.u32 %s29, 1
        %s184 = scalar_lea.sflag [#allocation3], %s183
        %s185 = sand.u32 %s29, 1
        %s186 = smul.addr %s185, 8
        %s187 = scalar_lea.vmem [#allocation2], %s186
        %p188 = pneg %p42
        %p189 = pneg %p39
        %p190 = pneg %p63
        %p191 = pneg %p60
        %p192 = pneg %p84
        %p193 = pneg %p81
        %p194 = pneg %p110
        %p195 = pneg %p107
        %s196 = sand.u32 %s97, 1
        %s197 = scalar_lea.sflag [#allocation4], %s196
        %s198 = sand.u32 %s97, 1
        %s199 = smul.addr %s198, 8
        %s200 = scalar_lea.vmem [#allocation7], %s199
        %v202 = vld [vmem:[%s174] sm:$0xff]
        %v203 = vpack.c.bf16 %v202, %v202
        %v204 = vld [vmem:[#allocation5] sm:$0xf]
        %v205 = vld [vmem:[#allocation5 + $0x4] sm:$0xf]
        %v206 = vld [vmem:[#allocation5 + $0x8] sm:$0xf]
        %v207 = vld [vmem:[#allocation5 + $0xc] sm:$0xf]
        %v208 = vld [vmem:[#allocation5 + $0x10] sm:$0xf]
        %v209 = vld [vmem:[#allocation5 + $0x14] sm:$0xf]
        %v210 = vld [vmem:[#allocation5 + $0x18] sm:$0xf]
        %v211 = vld [vmem:[#allocation5 + $0x1c] sm:$0xf]
        %v212 = vld [vmem:[#allocation5 + $0x20] sm:$0xf]
        %v213 = vld [vmem:[#allocation5 + $0x24] sm:$0xf]
        %v214 = vld [vmem:[#allocation5 + $0x28] sm:$0xf]
        %v215 = vld [vmem:[#allocation5 + $0x2c] sm:$0xf]
        %v216 = vld [vmem:[#allocation5 + $0x30] sm:$0xf]
        %v217 = vld [vmem:[#allocation5 + $0x34] sm:$0xf]
        %v218 = vld [vmem:[#allocation5 + $0x38] sm:$0xf]
        %v219 = vld [vmem:[#allocation5 + $0x3c] sm:$0xf]
        %v220 = vld [vmem:[%s2] sm:$0x1]
        %v222 = vlaneseq
        %v223 = vshrl.u32 %v222, 7
        %v224 = vsub.s32 0, %v223
        %v225 = vrot.slane %v220, %v224
        %v243 = vunpack.c.l.b16 %v204
        %v244 = vunpack.c.l.b16 %v205
        %v245 = vunpack.c.l.b16 %v206
        %v246 = vunpack.c.l.b16 %v207
        %v247 = vunpack.c.l.b16 %v208
        %v248 = vunpack.c.l.b16 %v209
        %v249 = vunpack.c.l.b16 %v210
        %v250 = vunpack.c.l.b16 %v211
        %v251 = vunpack.c.l.b16 %v212
        %v252 = vunpack.c.l.b16 %v213
        %v253 = vunpack.c.l.b16 %v214
        %v254 = vunpack.c.l.b16 %v215
        %v255 = vunpack.c.l.b16 %v216
        %v256 = vunpack.c.l.b16 %v217
        %v257 = vunpack.c.l.b16 %v218
        %v258 = vunpack.c.l.b16 %v219
        %v259 = vpack.c.b16 %v244, %v243
        %v260 = vpack.c.b16 %v246, %v245
        %v261 = vpack.c.b16 %v248, %v247
        %v262 = vpack.c.b16 %v250, %v249
        %v263 = vpack.c.b16 %v252, %v251
        %v264 = vpack.c.b16 %v254, %v253
        %v265 = vpack.c.b16 %v256, %v255
        %v266 = vpack.c.b16 %v258, %v257
        %275 = vmatprep.subr.bf16.mxu0 0
        %276 = vmatpush1.bf16.msra.mxu0 %v266
        %277 = vmatprep.subr.bf16.mxu0 0
        %278 = vmatpush1.bf16.msra.mxu0 %v265
        %279 = vmatprep.subr.bf16.mxu0 0
        %280 = vmatpush1.bf16.msra.mxu0 %v264
        %281 = vmatprep.subr.bf16.mxu0 0
        %282 = vmatpush1.bf16.msra.mxu0 %v263
        %283 = vmatprep.subr.bf16.mxu0 0
        %284 = vmatpush1.bf16.msra.mxu0 %v262
        %285 = vmatprep.subr.bf16.mxu0 0
        %286 = vmatpush1.bf16.msra.mxu0 %v261
        %287 = vmatprep.subr.bf16.mxu0 0
        %288 = vmatpush1.bf16.msra.mxu0 %v260
        %289 = vmatprep.subr.bf16.mxu0 0
        %290 = vmatpush1.bf16.msra.mxu0 %v259
        %291 = vmatprep.subr.bf16.mxu0 0
        %292 = vmatpush2.bf16.msra.mxu0 0
        %293 = vmatprep.subr.bf16.mxu0 0
        %294 = vmatpush2.bf16.msra.mxu0 0
        %295 = vmatprep.subr.bf16.mxu0 0
        %296 = vmatpush2.bf16.msra.mxu0 0
        %297 = vmatprep.subr.bf16.mxu0 0
        %298 = vmatpush2.bf16.msra.mxu0 0
        %299 = vmatprep.subr.bf16.mxu0 0
        %300 = vmatpush2.bf16.msra.mxu0 0
        %301 = vmatprep.subr.bf16.mxu0 0
        %302 = vmatpush2.bf16.msra.mxu0 0
        %303 = vmatprep.subr.bf16.mxu0 0
        %304 = vmatpush2.bf16.msra.mxu0 0
        %305 = vmatprep.subr.bf16.mxu0 0
        %306 = vmatpush2.bf16.msra.mxu0 0
        %307 = vmatprep.mubr.bf16.mxu0 0
        %308 = vmatmul.mubr.bf16.gmra.mxu0 %v203
        %v309 = vpop.f32.mrf.mxu0
        %v310 = vadd.f32 %v225, %v309
        %v311 = vpop.f32.mrf.mxu0
        %v312 = vpop.f32.mrf.mxu0
        %v313 = vpop.f32.mrf.mxu0
        %314 = vdwg.mxu0
        %v315 = vadd.f32 %v310, %v202
        %316 = vst [vmem:[%s200] sm:$0xff] %v315
        %s317 = sand.u32 %s97, 1
        %s318 = scalar_lea.sflag [#allocation4], %s317
        %s319 = sand.u32 %s97, 1
        %s320 = smul.addr %s319, 8
        %s321 = scalar_lea.vmem [#allocation7], %s320
        // Predicated region
        $region41: #{tpu_custom_call.1} parent=31 // pred_check
          %p322 = pneg %p107
        $region42: #{tpu_custom_call.1} parent=31 // pred_check_branch
          %324 = sbr.rel (%p322) target = $region44
        $region43: #{tpu_custom_call.1} parent=31 // pred_region
          %s326 = ssub.s32 128, 128
          %327 = vsyncadd %s318, %s326
          %s328 = smul.addr %s21, 128
          %s329 = scalar_lea.hbm %s3, %s328
          %s331 = sshll.u32 %s321, 4
          %s332 = int_to_ptr.vmem [resolvable:$true] %s331
          %334 = dma.vmem_to_hbm [thread:$0]  %s332, 128, %s329, %s318
        $region44: #{tpu_custom_call.1} parent=31 // pred_fallthru
          _
      $region32: #{tpu_custom_call.1} parent=5 // pred_fallthru
        _
      %p335 = scmp.le.s32.totalorder 2, %s16
      // Predicated region
      $region45: #{tpu_custom_call.1} parent=5 // pred_check
        %p336 = pneg %p335
      $region46: #{tpu_custom_call.1} parent=5 // pred_check_branch
        %338 = sbr.rel (%p336) target = $region48
      $region47: #{tpu_custom_call.1} parent=5 // pred_region
        %s339 = ssub.s32 %s16, 2
        // Predicated region
        $region49: #{tpu_custom_call.1} parent=47 // pred_check
          %p340 = pneg %p113
        $region50: #{tpu_custom_call.1} parent=47 // pred_check_branch
          %342 = sbr.rel (%p340) target = $region52
        $region51: #{tpu_custom_call.1} parent=47 // pred_region
          %s343 = sand.u32 %s98, 1
          %s344 = scalar_lea.sflag [#allocation4], %s343
          %s345 = sand.u32 %s98, 1
          %s346 = smul.addr %s345, 8
          %s347 = scalar_lea.vmem [#allocation7], %s346
          %348 = dma.done %s344, 128
        $region52: #{tpu_custom_call.1} parent=47 // pred_fallthru
          _
      $region48: #{tpu_custom_call.1} parent=5 // pred_fallthru
        _
    $region6: #{tpu_custom_call.1} parent=1 // loop_footer
      %s20 = sadd.s32 1, %s16
    $region7: #{tpu_custom_call.1} parent=1 // loop_footer_branch
      %15 = sbr.rel target = $region3
    $region8: #{tpu_custom_call.1} parent=1 // loop_exit
      _
    %349 = vsyncpa [#allocation3], 1
    %s350 = scalar_lea.sflag [#allocation3], 1
    %351 = vsyncpa %s350, 1
    %352 = vsyncpa [#allocation6], 1
    %353 = vsyncpa [#allocation4], 1
    %s354 = scalar_lea.sflag [#allocation4], 1
    %355 = vsyncpa %s354, 1

</llo_original>
